<compile_context>
chip_gen: v5e
topology: v5e:2x2
jax: 0.10.0
libtpu: 0.0.40
codegen_flags: <defaults>
</compile_context>

<pallas_src>
import functools
import math

import jax
import jax.numpy as jnp
from jax import lax
from jax.experimental import pallas as pl
from jax.experimental.pallas import tpu as pltpu


# 40 MiB: leaves headroom inside v7x's 64 MiB/TC physical VMEM, raises v5e's 16 MiB
# scoped default, and is far under v5e/v6e's 128 MiB physical VMEM.
_VMEM_LIMIT_BYTES = 40 * 1024 * 1024


def _layernorm(x, gamma, beta, eps=1e-5):
    mu = jnp.mean(x, axis=-1, keepdims=True)
    var = jnp.mean((x - mu) ** 2, axis=-1, keepdims=True)
    return (x - mu) * lax.rsqrt(var + eps) * gamma + beta


def _gelu_exact(x):
    # exact (erf) GELU, matching torch.nn.GELU() default
    return 0.5 * x * (1.0 + lax.erf(x * (1.0 / math.sqrt(2.0))))


def _heads_per_group(num_heads, head_dim):
    """Smallest divisor G of num_heads such that G*head_dim is a multiple of 128
    (lane-aligned q/k/v slices and full-lane output stores).  Falls back to a single
    group (G == num_heads, group width == C == full last dim, always block-legal)."""
    for g in range(1, num_heads + 1):
        if num_heads % g == 0 and (g * head_dim) % 128 == 0:
            return g
    return num_heads


@functools.lru_cache(maxsize=None)
def _weight_pipeline_mode():
    """One-time capability probe for single-buffered (grid-invariant) BlockSpecs.

    This replaces the old per-call broad try/except around the production pallas_call:
    the probe kernel is trivial, so a failure here can only mean the pipeline_mode /
    pl.Buffered API is unavailable, never a masked error in the real kernels."""
    if not hasattr(pl, "Buffered"):
        return None

    def _copy(x_ref, o_ref):
        o_ref[...] = x_ref[...]

    try:
        spec = pl.BlockSpec((8, 128), lambda i: (0, 0), pipeline_mode=pl.Buffered(1))
        x = jnp.zeros((8, 128), jnp.float32)
        out = pl.pallas_call(
            _copy,
            out_shape=jax.ShapeDtypeStruct((8, 128), jnp.float32),
            grid=(1,),
            in_specs=[spec],
            out_specs=pl.BlockSpec((8, 128), lambda i: (0, 0)),
        )(x)
        jax.block_until_ready(out)
        return pl.Buffered(1)
    except Exception:  # capability probe only -- not wrapping production kernels
        return None


# --------------------------------------------------------------------------- kernels
def _attn_kernel(x_ref, g1_ref, b1_ref, wqkv_ref, bqkv_ref, o_ref, *,
                 head_dim, heads_per_group):
    f32 = jnp.float32
    bf16 = jnp.bfloat16
    g = pl.program_id(1)                       # head-group index
    gd = heads_per_group * head_dim

    # LayerNorm1 of the (N, C) block.  Recomputed per head group (pure VPU work,
    # overlapped with the MXU matmuls) -> no carried scratch, both grid axes parallel.
    hn = _layernorm(x_ref[...].astype(f32), g1_ref[...], b1_ref[...]).astype(bf16)

    # Fused QKV projection for this head group: (N, C) @ (C, 3*G*Dh), f32 accumulation.
    # The full weight tensor is VMEM-resident; indexing its leading axis is just
    # address arithmetic (no re-DMA, no lane shuffles).
    w = wqkv_ref[g]                                                   # (C, 3*GD) bf16
    bqkv = bqkv_ref[g]                                                # (1, 3*GD) f32
    qkv = jnp.dot(hn, w, preferred_element_type=f32) + bqkv           # (N, 3*GD) f32

    # Lane-aligned group slices (GD is a multiple of 128, or the full width).
    q = qkv[:, :gd].astype(bf16)        # 1/sqrt(Dh) already folded into the weights
    k = qkv[:, gd:2 * gd].astype(bf16)
    v = qkv[:, 2 * gd:].astype(bf16)

    outs = []
    for j in range(heads_per_group):            # small unrolled per-head loop
        lo, hi = j * head_dim, (j + 1) * head_dim
        qh, kh, vh = q[:, lo:hi], k[:, lo:hi], v[:, lo:hi]
        # scores q @ k^T without materializing a transposed copy (contract dim 1)
        s = lax.dot_general(qh, kh, (((1,), (1,)), ((), ())),
                            preferred_element_type=f32)               # (N, N) f32
        m = jnp.max(s, axis=-1, keepdims=True)
        p = jnp.exp(s - m)
        l = jnp.sum(p, axis=-1, keepdims=True)
        pw = (p * pl.reciprocal(l, approx=True)).astype(bf16)         # EUP reciprocal
        outs.append(jnp.dot(pw, vh, preferred_element_type=f32))      # (N, Dh) f32

    o = outs[0] if len(outs) == 1 else jnp.concatenate(outs, axis=-1)  # (N, GD)
    o_ref[...] = o.astype(o_ref.dtype)          # full-lane store, (B, N, C) layout


def _proj_mlp_kernel(x_ref, a_ref, wp_ref, bp_ref, g2_ref, b2_ref,
                     w1_ref, bm1_ref, w2_ref, bm2_ref, o_ref):
    f32 = jnp.float32
    bf16 = jnp.bfloat16
    x = x_ref[...].astype(f32)                                         # (TM, C)

    # attention output projection + residual 1
    x1 = x + jnp.dot(a_ref[...], wp_ref[...],
                     preferred_element_type=f32) + bp_ref[...]

    # MLP branch
    h2 = _layernorm(x1, g2_ref[...], b2_ref[...]).astype(bf16)
    m = jnp.dot(h2, w1_ref[...], preferred_element_type=f32) + bm1_ref[...]
    m = _gelu_exact(m).astype(bf16)
    y = jnp.dot(m, w2_ref[...], preferred_element_type=f32) + bm2_ref[...]

    o_ref[...] = (x1 + y).astype(o_ref.dtype)                          # residual 2


# --------------------------------------------------------------------------- wrappers
def prepare_params(params, *, num_heads):
    """Raw f32 params (weights laid out (in, out)) -> kernel-layout params:
    bf16 matmul weights, group-fused QKV weight (n_groups, C, 3*G*Dh) with the
    1/sqrt(Dh) attention scale folded (in f32) into the q columns."""
    C = params["wqkv"].shape[0]
    H = num_heads
    Dh = C // H
    G = _heads_per_group(H, Dh)
    n_groups = H // G
    scale = Dh ** (-0.5)
    qscale = jnp.array([scale, 1.0, 1.0], jnp.float32)

    # columns of wqkv are ordered (3, H, Dh) = (3, n_groups, G, Dh)
    w5 = params["wqkv"].reshape(C, 3, n_groups, G, Dh) * qscale.reshape(1, 3, 1, 1, 1)
    w_qkv = jnp.transpose(w5, (2, 0, 1, 3, 4)).reshape(n_groups, C, 3 * G * Dh)
    b4 = params["bqkv"].reshape(3, n_groups, G, Dh) * qscale.reshape(3, 1, 1, 1)
    b_qkv = jnp.transpose(b4, (1, 0, 2, 3)).reshape(n_groups, 1, 3 * G * Dh)

    return {
        "g1": params["g1"], "b1": params["b1"],
        "w_qkv": w_qkv.astype(jnp.bfloat16), "b_qkv": b_qkv.astype(jnp.float32),
        "wp": params["wp"].astype(jnp.bfloat16), "bp": params["bp"],
        "g2": params["g2"], "b2": params["b2"],
        "w1": params["w1"].astype(jnp.bfloat16), "bm1": params["bm1"],
        "w2": params["w2"].astype(jnp.bfloat16), "bm2": params["bm2"],
    }


def _attention(x, prep, *, num_heads):
    B, N, C = x.shape
    H = num_heads
    Dh = C // H
    n_groups = prep["w_qkv"].shape[0]
    G = H // n_groups
    GD = G * Dh
    wmode = _weight_pipeline_mode()

    def wspec(shape, index_map):
        if wmode is None:
            return pl.BlockSpec(shape, index_map)
        return pl.BlockSpec(shape, index_map, pipeline_mode=wmode)

    kernel = functools.partial(_attn_kernel, head_dim=Dh, heads_per_group=G)
    flops = B * (2 * N * C * 3 * C + 4 * H * N * N * Dh + 10 * N * C * n_groups)
    bytes_accessed = (B * N * C * 4 + C * 3 * C * 2 + 3 * C * 4
                      + B * N * C * 2 + 4 * C * 4)

    return pl.pallas_call(
        kernel,
        out_shape=jax.ShapeDtypeStruct((B, N, C), jnp.bfloat16),   # lane-dense (B,N,C)
        grid_spec=pltpu.PrefetchScalarGridSpec(
            num_scalar_prefetch=0,
            grid=(B, n_groups),
            in_specs=[
                # x block index only changes with b -> DMA'd once per batch element
                pl.BlockSpec((None, N, C), lambda b, g: (b, 0, 0)),
                wspec((1, C), lambda b, g: (0, 0)),                  # ln1 gamma
                wspec((1, C), lambda b, g: (0, 0)),                  # ln1 beta
                # full QKV weight/bias resident in VMEM, DMA'd from HBM exactly once
                wspec((n_groups, C, 3 * GD), lambda b, g: (0, 0, 0)),
                wspec((n_groups, 1, 3 * GD), lambda b, g: (0, 0, 0)),
            ],
            out_specs=pl.BlockSpec((None, N, GD), lambda b, g: (b, 0, g)),
        ),
        compiler_params=pltpu.CompilerParams(
            dimension_semantics=("parallel", "parallel"),
            vmem_limit_bytes=_VMEM_LIMIT_BYTES),
        cost_estimate=pl.CostEstimate(flops=flops, transcendentals=B * H * N * N,
                                      bytes_accessed=bytes_accessed),
    )(x, prep["g1"], prep["b1"], prep["w_qkv"], prep["b_qkv"])


def _pick_row_tile(rows, *, min_steps=4):
    """Row tile for kernel B: multiple of 128, capped at 256 (v7x VMEM budget), and
    small enough that the grid has >= min_steps steps so the BlockSpec pipeline can
    actually overlap DMA with compute.  Tiny/ragged row counts fall back to a single
    full block."""
    if rows % 128 != 0:
        return rows
    for cand in (256, 128):
        if rows % cand == 0 and rows // cand >= min_steps:
            return cand
    return 128


def _proj_mlp(x_flat, attn_flat, prep):
    R, C = x_flat.shape
    hidden = prep["w1"].shape[1]
    TM = _pick_row_tile(R)
    wmode = _weight_pipeline_mode()

    def wspec(shape):
        index_map = lambda i: (0,) * len(shape)
        if wmode is None:
            return pl.BlockSpec(shape, index_map)
        return pl.BlockSpec(shape, index_map, pipeline_mode=wmode)

    def rowspec():
        return pl.BlockSpec((TM, C), lambda i: (i, 0))

    flops = R * (2 * C * C + 4 * C * hidden) + R * C * 16 + R * hidden * 8
    bytes_accessed = (R * C * (4 + 2 + 4) + (C * C + 2 * C * hidden) * 2
                      + (4 * C + hidden) * 4)
    return pl.pallas_call(
        _proj_mlp_kernel,
        out_shape=jax.ShapeDtypeStruct((R, C), x_flat.dtype),
        grid_spec=pltpu.PrefetchScalarGridSpec(
            num_scalar_prefetch=0,
            grid=(R // TM,),
            in_specs=[
                rowspec(),                                  # x rows (f32)
                rowspec(),                                  # attention rows (bf16)
                wspec((C, C)), wspec((1, C)),               # proj W, b
                wspec((1, C)), wspec((1, C)),               # ln2 gamma/beta
                wspec((C, hidden)), wspec((1, hidden)),     # fc1 W, b
                wspec((hidden, C)), wspec((1, C)),          # fc2 W, b
            ],
            out_specs=pl.BlockSpec((TM, C), lambda i: (i, 0)),
        ),
        compiler_params=pltpu.CompilerParams(
            dimension_semantics=("parallel",),
            vmem_limit_bytes=_VMEM_LIMIT_BYTES),
        cost_estimate=pl.CostEstimate(flops=flops, transcendentals=R * hidden,
                                      bytes_accessed=bytes_accessed),
    )(x_flat, attn_flat, prep["wp"], prep["bp"], prep["g2"], prep["b2"],
      prep["w1"], prep["bm1"], prep["w2"], prep["bm2"])


def block_forward(x, prep, *, num_heads):
    B, N, C = x.shape
    # Kernel A already emits (B, N, C) bf16 -> flat reshape is free (contiguous).
    attn = _attention(x, prep, num_heads=num_heads)
    out = _proj_mlp(x.reshape(B * N, C), attn.reshape(B * N, C), prep)
    return out.reshape(B, N, C)


# --------------------------------------------------------------------------- references
def block_reference_matched(x, prep, *, num_heads):
    """Pure-JAX reference using the same bf16 operand precision as the kernels."""
    f32 = jnp.float32
    bf16 = jnp.bfloat16
    B, N, C = x.shape
    H = num_heads
    Dh = C // H
    n_groups = prep["w_qkv"].shape[0]
    G = H // n_groups

    # unpack the group-fused QKV weights back to (C, 3, H, Dh) / (3, H, Dh)
    w = prep["w_qkv"].reshape(n_groups, C, 3, G, Dh)
    w = jnp.transpose(w, (1, 2, 0, 3, 4)).reshape(C, 3, H, Dh)
    bqkv = prep["b_qkv"].reshape(n_groups, 3, G, Dh)
    bqkv = jnp.transpose(bqkv, (1, 0, 2, 3)).reshape(3, H, Dh)

    hn = _layernorm(x.astype(f32), prep["g1"], prep["b1"]).astype(bf16)
    qkv = jnp.einsum("bnc,cthd->btnhd", hn, w,
                     preferred_element_type=f32) + bqkv[None, :, None]
    q = qkv[:, 0].astype(bf16)                                        # (B, N, H, Dh)
    k = qkv[:, 1].astype(bf16)
    v = qkv[:, 2].astype(bf16)
    s = jnp.einsum("bnhd,bmhd->bhnm", q, k, preferred_element_type=f32)
    s = s - jnp.max(s, axis=-1, keepdims=True)
    p = jnp.exp(s)
    pw = (p / jnp.sum(p, axis=-1, keepdims=True)).astype(bf16)
    o = jnp.einsum("bhnm,bmhd->bnhd", pw, v, preferred_element_type=f32)
    o = o.reshape(B, N, C).astype(bf16)

    x1 = x + jnp.einsum("bnc,co->bno", o, prep["wp"],
                        preferred_element_type=f32) + prep["bp"]
    h2 = _layernorm(x1, prep["g2"], prep["b2"]).astype(bf16)
    m = jnp.einsum("bnc,ch->bnh", h2, prep["w1"],
                   preferred_element_type=f32) + prep["bm1"]
    m = _gelu_exact(m).astype(bf16)
    y = jnp.einsum("bnh,hc->bnc", m, prep["w2"],
                   preferred_element_type=f32) + prep["bm2"]
    return x1 + y


def block_reference_f32(x, params, *, num_heads):
    """Full-precision reference mirroring the PyTorch module."""
    B, N, C = x.shape
    Dh = C // num_heads
    scale = Dh ** (-0.5)
    h = _layernorm(x, params["g1"], params["b1"])
    qkv = h @ params["wqkv"] + params["bqkv"]
    qkv = qkv.reshape(B, N, 3, num_heads, Dh).transpose(2, 0, 3, 1, 4)
    q, k, v = qkv[0], qkv[1], qkv[2]
    attn = jnp.einsum("bhnd,bhmd->bhnm", q, k) * scale
    attn = jax.nn.softmax(attn, axis=-1)
    o = jnp.einsum("bhnm,bhmd->bhnd", attn, v)
    o = o.transpose(0, 2, 1, 3).reshape(B, N, C)
    x1 = x + (o @ params["wp"] + params["bp"])
    h2 = _layernorm(x1, params["g2"], params["b2"])
    m = h2 @ params["w1"] + params["bm1"]
    m = jax.nn.gelu(m, approximate=False)
    m = m @ params["w2"] + params["bm2"]
    return x1 + m


def init_params(key, dim, num_heads, mlp_ratio=4.0):
    hidden = int(dim * mlp_ratio)
    keys = jax.random.split(key, 8)
    scl = 0.05
    return {
        "g1":   jnp.ones((1, dim), jnp.float32),
        "b1":   jnp.zeros((1, dim), jnp.float32),
        "wqkv": scl * jax.random.normal(keys[0], (dim, 3 * dim), jnp.float32),
        "bqkv": scl * jax.random.normal(keys[1], (1, 3 * dim), jnp.float32),
        "wp":   scl * jax.random.normal(keys[2], (dim, dim), jnp.float32),
        "bp":   scl * jax.random.normal(keys[3], (1, dim), jnp.float32),
        "g2":   jnp.ones((1, dim), jnp.float32),
        "b2":   jnp.zeros((1, dim), jnp.float32),
        "w1":   scl * jax.random.normal(keys[4], (dim, hidden), jnp.float32),
        "bm1":  scl * jax.random.normal(keys[5], (1, hidden), jnp.float32),
        "w2":   scl * jax.random.normal(keys[6], (hidden, dim), jnp.float32),
        "bm2":  scl * jax.random.normal(keys[7], (1, dim), jnp.float32),
    }


if __name__ == "__main__":
    B, N, C = 2, 8, 32
    num_heads = 4

    key = jax.random.PRNGKey(0)
    kx, kp = jax.random.split(key)
    x = jax.random.normal(kx, (B, N, C), jnp.float32)
    params = init_params(kp, C, num_heads)
    prep = prepare_params(params, num_heads=num_heads)

    out = block_forward(x, prep, num_heads=num_heads)
    out = jax.block_until_ready(out)
    assert out.shape == (B, N, C)

    ref_m = block_reference_matched(x, prep, num_heads=num_heads)
    ref_f = block_reference_f32(x, params, num_heads=num_heads)
    err_m = float(jnp.max(jnp.abs(out - ref_m)))
    err_f = float(jnp.max(jnp.abs(out - ref_f)))
    assert jnp.allclose(out, ref_m, atol=1e-2, rtol=1e-2), \
        f"matched-precision max abs err {err_m}"
    assert jnp.allclose(out, ref_f, atol=5e-2, rtol=5e-2), \
        f"f32-reference max abs err {err_f}"

    print("KERNEL_OK")
</pallas_src>

<mosaic_0001>
module attributes {stable_mosaic.version = 11 : i64} {
  func.func @_copy(%arg0: i32, %arg1: memref<8x128xf32, #tpu.memory_space<vmem>>, %arg2: memref<8x128xf32, #tpu.memory_space<vmem>>) attributes {dimension_semantics = [#tpu.dimension_semantics<arbitrary>], iteration_bounds = array<i64: 1>, scalar_prefetch = 0 : i64, scratch_operands = 0 : i64, tpu.core_type = #tpu.core_type<tc>, window_params = [{pipeline_mode = #tpu.pipeline_mode<synchronous>, transform_indices = @transform_0, window_bounds = array<i64: 8, 128>}, {pipeline_mode = #tpu.pipeline_mode<synchronous>, transform_indices = @transform_1, window_bounds = array<i64: 8, 128>}]} {
    %c0 = arith.constant 0 : index
    %c0_0 = arith.constant 0 : index
    %0 = vector.load %arg1[%c0, %c0_0] : memref<8x128xf32, #tpu.memory_space<vmem>>, vector<8x128xf32>
    %c0_1 = arith.constant 0 : index
    %c0_2 = arith.constant 0 : index
    %1 = vector.load %arg2[%c0_1, %c0_2] : memref<8x128xf32, #tpu.memory_space<vmem>>, vector<8x128xf32>
    tpu.vector_store %arg2[%c0_1, %c0_2], %0 {strides = array<i32>} : memref<8x128xf32, #tpu.memory_space<vmem>>, vector<8x128xf32>,
    return
  }
  func.func @transform_0(%arg0: i32) -> (i32, i32) {
    %c0_i32 = arith.constant 0 : i32
    %c0_i32_0 = arith.constant 0 : i32
    %c0_i32_1 = arith.constant 0 : i32
    return %c0_i32, %c0_i32_0 : i32, i32
  }
  func.func @transform_1(%arg0: i32) -> (i32, i32) {
    %c0_i32 = arith.constant 0 : i32
    %c0_i32_0 = arith.constant 0 : i32
    %c0_i32_1 = arith.constant 0 : i32
    return %c0_i32, %c0_i32_0 : i32, i32
  }
}

module attributes {stable_mosaic.version = 11 : i64} {
  func.func @_attn_kernel(%arg0: i32, %arg1: i32, %arg2: memref<1x8x32xf32, #tpu.memory_space<vmem>>, %arg3: memref<1x32xf32, #tpu.memory_space<vmem>>, %arg4: memref<1x32xf32, #tpu.memory_space<vmem>>, %arg5: memref<1x32x96xbf16, #tpu.memory_space<vmem>>, %arg6: memref<1x1x96xf32, #tpu.memory_space<vmem>>, %arg7: memref<1x8x32xbf16, #tpu.memory_space<vmem>>) attributes {dimension_semantics = [#tpu.dimension_semantics<parallel>, #tpu.dimension_semantics<parallel>], iteration_bounds = array<i64: 2, 1>, scalar_prefetch = 0 : i64, scratch_operands = 0 : i64, tpu.core_type = #tpu.core_type<tc>, window_params = [{transform_indices = @transform_0, window_bounds = array<i64: 1, 8, 32>}, {pipeline_mode = #tpu.pipeline_mode<synchronous>, transform_indices = @transform_1, window_bounds = array<i64: 1, 32>}, {pipeline_mode = #tpu.pipeline_mode<synchronous>, transform_indices = @transform_2, window_bounds = array<i64: 1, 32>}, {pipeline_mode = #tpu.pipeline_mode<synchronous>, transform_indices = @transform_3, window_bounds = array<i64: 1, 32, 96>}, {pipeline_mode = #tpu.pipeline_mode<synchronous>, transform_indices = @transform_4, window_bounds = array<i64: 1, 1, 96>}, {transform_indices = @transform_5, window_bounds = array<i64: 1, 8, 32>}]} {
    %c0 = arith.constant 0 : index
    %c0_0 = arith.constant 0 : index
    %c0_1 = arith.constant 0 : index
    %0 = vector.load %arg2[%c0, %c0_0, %c0_1] : memref<1x8x32xf32, #tpu.memory_space<vmem>>, vector<1x8x32xf32>
    %1 = vector.shape_cast %0 : vector<1x8x32xf32> to vector<8x32xf32>
    %c0_2 = arith.constant 0 : index
    %c0_3 = arith.constant 0 : index
    %2 = vector.load %arg3[%c0_2, %c0_3] : memref<1x32xf32, #tpu.memory_space<vmem>>, vector<1x32xf32>
    %c0_4 = arith.constant 0 : index
    %c0_5 = arith.constant 0 : index
    %3 = vector.load %arg4[%c0_4, %c0_5] : memref<1x32xf32, #tpu.memory_space<vmem>>, vector<1x32xf32>
    %cst = arith.constant dense<0.000000e+00> : vector<8xf32>
    %4 = vector.multi_reduction <add>, %1, %cst [1] : vector<8x32xf32> to vector<8xf32>
    %5 = vector.shape_cast %4 : vector<8xf32> to vector<8x1xf32>
    %cst_6 = arith.constant 3.200000e+01 : f32
    %6 = vector.broadcast %cst_6 : f32 to vector<8x1xf32>
    %7 = arith.divf %5, %6 : vector<8x1xf32>
    %8 = vector.broadcast %7 : vector<8x1xf32> to vector<8x32xf32>
    %9 = arith.subf %1, %8 : vector<8x32xf32>
    %10 = arith.mulf %9, %9 : vector<8x32xf32>
    %cst_7 = arith.constant dense<0.000000e+00> : vector<8xf32>
    %11 = vector.multi_reduction <add>, %10, %cst_7 [1] : vector<8x32xf32> to vector<8xf32>
    %12 = vector.shape_cast %11 : vector<8xf32> to vector<8x1xf32>
    %cst_8 = arith.constant 3.200000e+01 : f32
    %13 = vector.broadcast %cst_8 : f32 to vector<8x1xf32>
    %14 = arith.divf %12, %13 : vector<8x1xf32>
    %15 = vector.broadcast %7 : vector<8x1xf32> to vector<8x32xf32>
    %16 = arith.subf %1, %15 : vector<8x32xf32>
    %cst_9 = arith.constant 9.99999974E-6 : f32
    %17 = vector.broadcast %cst_9 : f32 to vector<8x1xf32>
    %18 = arith.addf %14, %17 : vector<8x1xf32>
    %19 = math.rsqrt %18 : vector<8x1xf32>
    %20 = vector.broadcast %19 : vector<8x1xf32> to vector<8x32xf32>
    %21 = arith.mulf %16, %20 : vector<8x32xf32>
    %22 = vector.broadcast %2 : vector<1x32xf32> to vector<8x32xf32>
    %23 = arith.mulf %21, %22 : vector<8x32xf32>
    %24 = vector.broadcast %3 : vector<1x32xf32> to vector<8x32xf32>
    %25 = arith.addf %23, %24 : vector<8x32xf32>
    %26 = arith.truncf %25 : vector<8x32xf32> to vector<8x32xbf16>
    %27 = arith.index_cast %arg1 : i32 to index
    %c0_10 = arith.constant 0 : index
    %c0_11 = arith.constant 0 : index
    %28 = vector.load %arg5[%27, %c0_10, %c0_11] : memref<1x32x96xbf16, #tpu.memory_space<vmem>>, vector<1x32x96xbf16>
    %29 = vector.shape_cast %28 : vector<1x32x96xbf16> to vector<32x96xbf16>
    %30 = arith.index_cast %arg1 : i32 to index
    %c0_12 = arith.constant 0 : index
    %c0_13 = arith.constant 0 : index
    %31 = vector.load %arg6[%30, %c0_12, %c0_13] : memref<1x1x96xf32, #tpu.memory_space<vmem>>, vector<1x1x96xf32>
    %32 = vector.shape_cast %31 : vector<1x1x96xf32> to vector<1x96xf32>
    %cst_14 = arith.constant dense<0.000000e+00> : vector<8x96xf32>
    %33 = tpu.matmul %26, %29, %cst_14 {dimension_numbers = #tpu.dot_dimension_numbers<[1], [0], [0], [1], [0, 0, 1, 1], [], []>} : vector<8x32xbf16>, vector<32x96xbf16>, vector<8x96xf32> -> vector<8x96xf32>
    %34 = vector.broadcast %32 : vector<1x96xf32> to vector<8x96xf32>
    %35 = arith.addf %33, %34 : vector<8x96xf32>
    %36 = vector.extract_strided_slice %35 {offsets = [0, 0], sizes = [8, 32], strides = [1, 1]} : vector<8x96xf32> to vector<8x32xf32>
    %37 = arith.truncf %36 : vector<8x32xf32> to vector<8x32xbf16>
    %38 = vector.extract_strided_slice %35 {offsets = [0, 32], sizes = [8, 32], strides = [1, 1]} : vector<8x96xf32> to vector<8x32xf32>
    %39 = arith.truncf %38 : vector<8x32xf32> to vector<8x32xbf16>
    %40 = vector.extract_strided_slice %35 {offsets = [0, 64], sizes = [8, 32], strides = [1, 1]} : vector<8x96xf32> to vector<8x32xf32>
    %41 = arith.truncf %40 : vector<8x32xf32> to vector<8x32xbf16>
    %42 = vector.extract_strided_slice %37 {offsets = [0, 0], sizes = [8, 8], strides = [1, 1]} : vector<8x32xbf16> to vector<8x8xbf16>
    %43 = vector.extract_strided_slice %39 {offsets = [0, 0], sizes = [8, 8], strides = [1, 1]} : vector<8x32xbf16> to vector<8x8xbf16>
    %44 = vector.extract_strided_slice %41 {offsets = [0, 0], sizes = [8, 8], strides = [1, 1]} : vector<8x32xbf16> to vector<8x8xbf16>
    %cst_15 = arith.constant dense<0.000000e+00> : vector<8x8xf32>
    %45 = tpu.matmul %42, %43, %cst_15 {dimension_numbers = #tpu.dot_dimension_numbers<[1], [1], [0], [0], [0, 0, 1, 0], [], []>} : vector<8x8xbf16>, vector<8x8xbf16>, vector<8x8xf32> -> vector<8x8xf32>
    %cst_16 = arith.constant dense<0xFF800000> : vector<8xf32>
    %46 = vector.multi_reduction <maximumf>, %45, %cst_16 [1] : vector<8x8xf32> to vector<8xf32>
    %47 = vector.shape_cast %46 : vector<8xf32> to vector<8x1xf32>
    %48 = vector.broadcast %47 : vector<8x1xf32> to vector<8x8xf32>
    %49 = arith.subf %45, %48 : vector<8x8xf32>
    %50 = math.exp %49 : vector<8x8xf32>
    %cst_17 = arith.constant dense<0.000000e+00> : vector<8xf32>
    %51 = vector.multi_reduction <add>, %50, %cst_17 [1] : vector<8x8xf32> to vector<8xf32>
    %52 = vector.shape_cast %51 : vector<8xf32> to vector<8x1xf32>
    %53 = tpu.reciprocal %52 {approx = true} : vector<8x1xf32> -> vector<8x1xf32>
    %54 = vector.broadcast %53 : vector<8x1xf32> to vector<8x8xf32>
    %55 = arith.mulf %50, %54 : vector<8x8xf32>
    %56 = arith.truncf %55 : vector<8x8xf32> to vector<8x8xbf16>
    %cst_18 = arith.constant dense<0.000000e+00> : vector<8x8xf32>
    %57 = tpu.matmul %56, %44, %cst_18 {dimension_numbers = #tpu.dot_dimension_numbers<[1], [0], [0], [1], [0, 0, 1, 1], [], []>} : vector<8x8xbf16>, vector<8x8xbf16>, vector<8x8xf32> -> vector<8x8xf32>
    %58 = vector.extract_strided_slice %37 {offsets = [0, 8], sizes = [8, 8], strides = [1, 1]} : vector<8x32xbf16> to vector<8x8xbf16>
    %59 = vector.extract_strided_slice %39 {offsets = [0, 8], sizes = [8, 8], strides = [1, 1]} : vector<8x32xbf16> to vector<8x8xbf16>
    %60 = vector.extract_strided_slice %41 {offsets = [0, 8], sizes = [8, 8], strides = [1, 1]} : vector<8x32xbf16> to vector<8x8xbf16>
    %cst_19 = arith.constant dense<0.000000e+00> : vector<8x8xf32>
    %61 = tpu.matmul %58, %59, %cst_19 {dimension_numbers = #tpu.dot_dimension_numbers<[1], [1], [0], [0], [0, 0, 1, 0], [], []>} : vector<8x8xbf16>, vector<8x8xbf16>, vector<8x8xf32> -> vector<8x8xf32>
    %cst_20 = arith.constant dense<0xFF800000> : vector<8xf32>
    %62 = vector.multi_reduction <maximumf>, %61, %cst_20 [1] : vector<8x8xf32> to vector<8xf32>
    %63 = vector.shape_cast %62 : vector<8xf32> to vector<8x1xf32>
    %64 = vector.broadcast %63 : vector<8x1xf32> to vector<8x8xf32>
    %65 = arith.subf %61, %64 : vector<8x8xf32>
    %66 = math.exp %65 : vector<8x8xf32>
    %cst_21 = arith.constant dense<0.000000e+00> : vector<8xf32>
    %67 = vector.multi_reduction <add>, %66, %cst_21 [1] : vector<8x8xf32> to vector<8xf32>
    %68 = vector.shape_cast %67 : vector<8xf32> to vector<8x1xf32>
    %69 = tpu.reciprocal %68 {approx = true} : vector<8x1xf32> -> vector<8x1xf32>
    %70 = vector.broadcast %69 : vector<8x1xf32> to vector<8x8xf32>
    %71 = arith.mulf %66, %70 : vector<8x8xf32>
    %72 = arith.truncf %71 : vector<8x8xf32> to vector<8x8xbf16>
    %cst_22 = arith.constant dense<0.000000e+00> : vector<8x8xf32>
    %73 = tpu.matmul %72, %60, %cst_22 {dimension_numbers = #tpu.dot_dimension_numbers<[1], [0], [0], [1], [0, 0, 1, 1], [], []>} : vector<8x8xbf16>, vector<8x8xbf16>, vector<8x8xf32> -> vector<8x8xf32>
    %74 = vector.extract_strided_slice %37 {offsets = [0, 16], sizes = [8, 8], strides = [1, 1]} : vector<8x32xbf16> to vector<8x8xbf16>
    %75 = vector.extract_strided_slice %39 {offsets = [0, 16], sizes = [8, 8], strides = [1, 1]} : vector<8x32xbf16> to vector<8x8xbf16>
    %76 = vector.extract_strided_slice %41 {offsets = [0, 16], sizes = [8, 8], strides = [1, 1]} : vector<8x32xbf16> to vector<8x8xbf16>
    %cst_23 = arith.constant dense<0.000000e+00> : vector<8x8xf32>
    %77 = tpu.matmul %74, %75, %cst_23 {dimension_numbers = #tpu.dot_dimension_numbers<[1], [1], [0], [0], [0, 0, 1, 0], [], []>} : vector<8x8xbf16>, vector<8x8xbf16>, vector<8x8xf32> -> vector<8x8xf32>
    %cst_24 = arith.constant dense<0xFF800000> : vector<8xf32>
    %78 = vector.multi_reduction <maximumf>, %77, %cst_24 [1] : vector<8x8xf32> to vector<8xf32>
    %79 = vector.shape_cast %78 : vector<8xf32> to vector<8x1xf32>
    %80 = vector.broadcast %79 : vector<8x1xf32> to vector<8x8xf32>
    %81 = arith.subf %77, %80 : vector<8x8xf32>
    %82 = math.exp %81 : vector<8x8xf32>
    %cst_25 = arith.constant dense<0.000000e+00> : vector<8xf32>
    %83 = vector.multi_reduction <add>, %82, %cst_25 [1] : vector<8x8xf32> to vector<8xf32>
    %84 = vector.shape_cast %83 : vector<8xf32> to vector<8x1xf32>
    %85 = tpu.reciprocal %84 {approx = true} : vector<8x1xf32> -> vector<8x1xf32>
    %86 = vector.broadcast %85 : vector<8x1xf32> to vector<8x8xf32>
    %87 = arith.mulf %82, %86 : vector<8x8xf32>
    %88 = arith.truncf %87 : vector<8x8xf32> to vector<8x8xbf16>
    %cst_26 = arith.constant dense<0.000000e+00> : vector<8x8xf32>
    %89 = tpu.matmul %88, %76, %cst_26 {dimension_numbers = #tpu.dot_dimension_numbers<[1], [0], [0], [1], [0, 0, 1, 1], [], []>} : vector<8x8xbf16>, vector<8x8xbf16>, vector<8x8xf32> -> vector<8x8xf32>
    %90 = vector.extract_strided_slice %37 {offsets = [0, 24], sizes = [8, 8], strides = [1, 1]} : vector<8x32xbf16> to vector<8x8xbf16>
    %91 = vector.extract_strided_slice %39 {offsets = [0, 24], sizes = [8, 8], strides = [1, 1]} : vector<8x32xbf16> to vector<8x8xbf16>
    %92 = vector.extract_strided_slice %41 {offsets = [0, 24], sizes = [8, 8], strides = [1, 1]} : vector<8x32xbf16> to vector<8x8xbf16>
    %cst_27 = arith.constant dense<0.000000e+00> : vector<8x8xf32>
    %93 = tpu.matmul %90, %91, %cst_27 {dimension_numbers = #tpu.dot_dimension_numbers<[1], [1], [0], [0], [0, 0, 1, 0], [], []>} : vector<8x8xbf16>, vector<8x8xbf16>, vector<8x8xf32> -> vector<8x8xf32>
    %cst_28 = arith.constant dense<0xFF800000> : vector<8xf32>
    %94 = vector.multi_reduction <maximumf>, %93, %cst_28 [1] : vector<8x8xf32> to vector<8xf32>
    %95 = vector.shape_cast %94 : vector<8xf32> to vector<8x1xf32>
    %96 = vector.broadcast %95 : vector<8x1xf32> to vector<8x8xf32>
    %97 = arith.subf %93, %96 : vector<8x8xf32>
    %98 = math.exp %97 : vector<8x8xf32>
    %cst_29 = arith.constant dense<0.000000e+00> : vector<8xf32>
    %99 = vector.multi_reduction <add>, %98, %cst_29 [1] : vector<8x8xf32> to vector<8xf32>
    %100 = vector.shape_cast %99 : vector<8xf32> to vector<8x1xf32>
    %101 = tpu.reciprocal %100 {approx = true} : vector<8x1xf32> -> vector<8x1xf32>
    %102 = vector.broadcast %101 : vector<8x1xf32> to vector<8x8xf32>
    %103 = arith.mulf %98, %102 : vector<8x8xf32>
    %104 = arith.truncf %103 : vector<8x8xf32> to vector<8x8xbf16>
    %cst_30 = arith.constant dense<0.000000e+00> : vector<8x8xf32>
    %105 = tpu.matmul %104, %92, %cst_30 {dimension_numbers = #tpu.dot_dimension_numbers<[1], [0], [0], [1], [0, 0, 1, 1], [], []>} : vector<8x8xbf16>, vector<8x8xbf16>, vector<8x8xf32> -> vector<8x8xf32>
    %106 = tpu.concatenate %57, %73, %89, %105 in 1 : vector<8x8xf32>, vector<8x8xf32>, vector<8x8xf32>, vector<8x8xf32> -> vector<8x32xf32>
    %107 = arith.truncf %106 : vector<8x32xf32> to vector<8x32xbf16>
    %c0_31 = arith.constant 0 : index
    %c0_32 = arith.constant 0 : index
    %c0_33 = arith.constant 0 : index
    %108 = vector.load %arg7[%c0_31, %c0_32, %c0_33] : memref<1x8x32xbf16, #tpu.memory_space<vmem>>, vector<1x8x32xbf16>
    %109 = vector.shape_cast %108 : vector<1x8x32xbf16> to vector<8x32xbf16>
    %110 = vector.shape_cast %107 : vector<8x32xbf16> to vector<1x8x32xbf16>
    tpu.vector_store %arg7[%c0_31, %c0_32, %c0_33], %110 {strides = array<i32>} : memref<1x8x32xbf16, #tpu.memory_space<vmem>>, vector<1x8x32xbf16>,
    return
  }
  func.func @transform_0(%arg0: i32, %arg1: i32) -> (i32, i32, i32) {
    %c0_i32 = arith.constant 0 : i32
    %c0_i32_0 = arith.constant 0 : i32
    %c0_i32_1 = arith.constant 0 : i32
    return %arg0, %c0_i32, %c0_i32_0 : i32, i32, i32
  }
  func.func @transform_1(%arg0: i32, %arg1: i32) -> (i32, i32) {
    %c0_i32 = arith.constant 0 : i32
    %c0_i32_0 = arith.constant 0 : i32
    %c0_i32_1 = arith.constant 0 : i32
    return %c0_i32, %c0_i32_0 : i32, i32
  }
  func.func @transform_2(%arg0: i32, %arg1: i32) -> (i32, i32) {
    %c0_i32 = arith.constant 0 : i32
    %c0_i32_0 = arith.constant 0 : i32
    %c0_i32_1 = arith.constant 0 : i32
    return %c0_i32, %c0_i32_0 : i32, i32
  }
  func.func @transform_3(%arg0: i32, %arg1: i32) -> (i32, i32, i32) {
    %c0_i32 = arith.constant 0 : i32
    %c0_i32_0 = arith.constant 0 : i32
    %c0_i32_1 = arith.constant 0 : i32
    %c0_i32_2 = arith.constant 0 : i32
    return %c0_i32, %c0_i32_0, %c0_i32_1 : i32, i32, i32
  }
  func.func @transform_4(%arg0: i32, %arg1: i32) -> (i32, i32, i32) {
    %c0_i32 = arith.constant 0 : i32
    %c0_i32_0 = arith.constant 0 : i32
    %c0_i32_1 = arith.constant 0 : i32
    %c0_i32_2 = arith.constant 0 : i32
    return %c0_i32, %c0_i32_0, %c0_i32_1 : i32, i32, i32
  }
  func.func @transform_5(%arg0: i32, %arg1: i32) -> (i32, i32, i32) {
    %c0_i32 = arith.constant 0 : i32
    %c0_i32_0 = arith.constant 0 : i32
    return %arg0, %c0_i32, %arg1 : i32, i32, i32
  }
}

</mosaic_0001>

<llo_original>
// kernel: tpu_custom_call.1
$region0: #{tpu_custom_call.1}
  #allocation0 [shape = 'u32[]', space=smem, size = 0x4, offset = 0x4, fixed_abs, tag = 'smem constant byte address 0x4 - core index']
  #allocation1 [shape = 'u32[72,128]{1,0:T(1,128)}', space=vmem, size = 0x9000, scoped, tag = 'internal scratch']
  %s0 = inlined_call_operand.hbm [shape: f32[8,128], index: 0, kind: input, shape index: {}]
  %s1 = inlined_call_operand.hbm [shape: f32[8,128], index: 1, kind: output, shape index: {}]
  %s2 = sld [smem:[#allocation0]]
  $region18: #{tpu_custom_call.1} parent=0
    _
  %s4 = ssub.s32 1, %s2
  %s5 = scalar_select 0, %s4, %s2
  $region1: #{tpu_custom_call.1} parent=0
    #allocation2 [shape = 'u8[4096]{0}', space=vmem, size = 0x1000, scoped, tag = 'input window, operand 0, single buffered']
    #allocation3 [shape = 's32[1]{0}', space=sflag, size = 0x4, scoped, tag = 'scoped memory for tpu_custom_call.1']
    #allocation4 [shape = 's32[1]{0}', space=sflag, size = 0x4, scoped, tag = 'scoped memory for tpu_custom_call.1']
    #allocation5 [shape = 'u8[4096]{0}', space=vmem, size = 0x1000, scoped, tag = 'output window, operand 0, single buffered']
    %6 = vsyncpa [#allocation3], 0
    %7 = vsyncpa [#allocation4], 0
    // Predicated region
    $region2: #{tpu_custom_call.1} parent=1 // pred_check
      _
    $region3: #{tpu_custom_call.1} parent=1 // pred_check_branch
      %9 = sbr.rel (0) target = $region5
    $region4: #{tpu_custom_call.1} parent=1 // pred_region
      %11 = vsyncadd [#allocation3], 0
      %s13 = sshll.u32 %s0, 4
      %s14 = int_to_ptr.hbm [resolvable:$true] %s13
      %s15 = sshll.u32 [#allocation2], 4
      %s16 = int_to_ptr.vmem [resolvable:$true] %s15
      %18 = dma.hbm_to_vmem [thread:$0]  %s14, 128, %s16, [#allocation3]
    $region5: #{tpu_custom_call.1} parent=1 // pred_fallthru
      _
    // Predicated region
    $region6: #{tpu_custom_call.1} parent=1 // pred_check
      _
    $region7: #{tpu_custom_call.1} parent=1 // pred_check_branch
      %20 = sbr.rel (0) target = $region9
    $region8: #{tpu_custom_call.1} parent=1 // pred_region
      %22 = dma.done [#allocation3], 128
    $region9: #{tpu_custom_call.1} parent=1 // pred_fallthru
      _
    %v23 = vld [vmem:[#allocation2] sm:$0xff]
    %24 = vst [vmem:[#allocation5] sm:$0xff] %v23
    // Predicated region
    $region10: #{tpu_custom_call.1} parent=1 // pred_check
      _
    $region11: #{tpu_custom_call.1} parent=1 // pred_check_branch
      %26 = sbr.rel (0) target = $region13
    $region12: #{tpu_custom_call.1} parent=1 // pred_region
      %28 = vsyncadd [#allocation4], 0
      %s30 = sshll.u32 [#allocation5], 4
      %s31 = int_to_ptr.vmem [resolvable:$true] %s30
      %s32 = sshll.u32 %s1, 4
      %s33 = int_to_ptr.hbm [resolvable:$true] %s32
      %35 = dma.vmem_to_hbm [thread:$0]  %s31, 128, %s33, [#allocation4]
    $region13: #{tpu_custom_call.1} parent=1 // pred_fallthru
      _
    // Predicated region
    $region14: #{tpu_custom_call.1} parent=1 // pred_check
      _
    $region15: #{tpu_custom_call.1} parent=1 // pred_check_branch
      %37 = sbr.rel (0) target = $region17
    $region16: #{tpu_custom_call.1} parent=1 // pred_region
      %39 = dma.done [#allocation4], 128
    $region17: #{tpu_custom_call.1} parent=1 // pred_fallthru
      _
    %40 = vsyncpa [#allocation3], 1
    %41 = vsyncpa [#allocation4], 1

// kernel: tpu_custom_call.1
$region0: #{tpu_custom_call.1}
  #allocation0 [shape = 'u32[]', space=smem, size = 0x4, offset = 0x4, fixed_abs, tag = 'smem constant byte address 0x4 - core index']
  #allocation1 [shape = 'u32[72,128]{1,0:T(1,128)}', space=vmem, size = 0x9000, scoped, tag = 'internal scratch']
  %s0 = inlined_call_operand.hbm [shape: f32[2,8,32], index: 0, kind: input, shape index: {}]
  %s1 = inlined_call_operand.hbm [shape: f32[1,32], index: 1, kind: input, shape index: {}]
  %s2 = inlined_call_operand.vmem [shape: f32[1,32], index: 2, kind: input, shape index: {}]
  %s3 = inlined_call_operand.hbm [shape: bf16[1,32,96], index: 3, kind: input, shape index: {}]
  %s4 = inlined_call_operand.vmem [shape: f32[1,1,96], index: 4, kind: input, shape index: {}]
  %s5 = inlined_call_operand.hbm [shape: bf16[2,8,32], index: 5, kind: output, shape index: {}]
  %s6 = sld [smem:[#allocation0]]
  $region65: #{tpu_custom_call.1} parent=0
    _
  %s8 = ssub.s32 1, %s6
  %s9 = scalar_select 0, %s8, %s6
  $region1: #{tpu_custom_call.1} parent=0
    #allocation2 [shape = 'u8[8192]{0}', space=vmem, size = 0x2000, scoped, tag = 'input window, operand 0']
    #allocation3 [shape = 's32[2]{0}', space=sflag, size = 0x8, scoped, tag = 'scoped memory for tpu_custom_call.1']
    #allocation4 [shape = 's32[2]{0}', space=sflag, size = 0x8, scoped, tag = 'scoped memory for tpu_custom_call.1']
    #allocation5 [shape = 'u8[512]{0}', space=vmem, size = 0x400, scoped, tag = 'input window, operand 1, single buffered']
    #allocation6 [shape = 's32[1]{0}', space=sflag, size = 0x4, scoped, tag = 'scoped memory for tpu_custom_call.1']
    #allocation7 [shape = 'u8[8192]{0}', space=vmem, size = 0x2000, scoped, tag = 'input window, operand 3, single buffered']
    #allocation8 [shape = 'u8[4096]{0}', space=vmem, size = 0x1000, scoped, tag = 'output window, operand 0']
    %10 = vsyncpa [#allocation3], 0
    %s11 = scalar_lea.sflag [#allocation3], 1
    %12 = vsyncpa %s11, 0
    %13 = vsyncpa [#allocation6], 0
    %14 = vsyncpa [#allocation4], 0
    %s15 = scalar_lea.sflag [#allocation4], 1
    %16 = vsyncpa %s15, 0
    loop: start=0, step=1, limit=4
    $region2: #{tpu_custom_call.1} parent=1 // loop_pre_header
      _
    $region3: #{tpu_custom_call.1} parent=1 // loop_header
      %s18 = sphi 0, %s22
      %p19 = scmp.ge.s32.totalorder %s18, 4
      %s25 = sphi 0, %s37
      %s26 = sphi 0, %s33
      %s27 = sphi 0, %s25
      %s28 = sphi 0, %s26
      %s29 = sphi 0, %s27
      %s30 = sphi 0, %s28
      %s40 = sphi 0, %s42
      %s43 = sphi 0, %s40
      %s44 = sphi 0, %s43
      %s60 = sphi 0, %s44
      %s64 = sphi 0, %s64
      %s66 = sphi 0, %s64
      %s67 = sphi 0, %s66
      %s81 = sphi 0, %s67
      %s85 = sphi 0, %s85
      %s87 = sphi 0, %s85
      %s88 = sphi 0, %s87
      %s102 = sphi 0, %s88
      %s106 = sphi 0, %s106
      %s108 = sphi 0, %s106
      %s109 = sphi 0, %s108
      %s123 = sphi 0, %s109
      %s127 = sphi 0, %s127
      %s129 = sphi 0, %s127
      %s130 = sphi 0, %s129
      %s144 = sphi 0, %s130
      %s152 = sphi 0, %s154
      %s155 = sphi 0, %s152
      %s156 = sphi 0, %s155
      %s172 = sphi 0, %s156
    $region4: #{tpu_custom_call.1} parent=1 // loop_header_branch
      %21 = sbr.rel (%p19) target = $region8
    $region5: #{tpu_custom_call.1} parent=1 // loop_body
      %s23 = ssub.s32 %s18, 1
      %s24 = ssub.s32 %s18, 2
      %s31 = sadd.s32 1, %s26
      %p32 = scmp.ge.s32.totalorder %s31, 1
      %s33 = scalar_select %p32, 0, %s31
      %s34 = sadd.s32 1, %s25
      %s35 = scalar_select %p32, %s34, %s25
      %p36 = scmp.ge.s32.totalorder %s35, 2
      %s37 = scalar_select %p36, 0, %s35
      %s38 = ssub.s32 %s25, %s37
      %p39 = scmp.eq.s32.totalorder %s38, 0
      %s41 = sadd.s32 %s40, 1
      %s42 = scalar_select %p39, %s40, %s41
      %p45 = pneg %p39
      %p46 = scmp.eq.s32.totalorder %s18, 1
      %p47 = por %p45, %p46
      %p48 = scmp.ne.s32.totalorder %s40, %s43
      %p49 = scmp.eq.s32.totalorder %s18, 0
      %p50 = por %p48, %p49
      %p51 = scmp.ne.s32.totalorder %s40, %s43
      %p52 = scmp.eq.s32.totalorder %s23, 1
      %p53 = por %p51, %p52
      %p54 = scmp.ne.s32.totalorder %s43, %s44
      %p55 = scmp.eq.s32.totalorder %s23, 0
      %p56 = por %p54, %p55
      %p57 = scmp.ne.s32.totalorder %s43, %s44
      %p58 = scmp.eq.s32.totalorder %s24, 1
      %p59 = por %p57, %p58
      %p61 = scmp.ne.s32.totalorder %s44, %s60
      %p62 = scmp.eq.s32.totalorder %s24, 0
      %p63 = por %p61, %p62
      %s65 = sadd.s32 %s64, 1
      %p68 = scmp.eq.s32.totalorder %s18, 1
      %p69 = scmp.ne.s32.totalorder %s64, %s66
      %p70 = scmp.eq.s32.totalorder %s18, 0
      %p71 = por %p69, %p70
      %p72 = scmp.ne.s32.totalorder %s64, %s66
      %p73 = scmp.eq.s32.totalorder %s23, 1
      %p74 = por %p72, %p73
      %p75 = scmp.ne.s32.totalorder %s66, %s67
      %p76 = scmp.eq.s32.totalorder %s23, 0
      %p77 = por %p75, %p76
      %p78 = scmp.ne.s32.totalorder %s66, %s67
      %p79 = scmp.eq.s32.totalorder %s24, 1
      %p80 = por %p78, %p79
      %p82 = scmp.ne.s32.totalorder %s67, %s81
      %p83 = scmp.eq.s32.totalorder %s24, 0
      %p84 = por %p82, %p83
      %s86 = sadd.s32 %s85, 1
      %p89 = scmp.eq.s32.totalorder %s18, 1
      %p90 = scmp.ne.s32.totalorder %s85, %s87
      %p91 = scmp.eq.s32.totalorder %s18, 0
      %p92 = por %p90, %p91
      %p93 = scmp.ne.s32.totalorder %s85, %s87
      %p94 = scmp.eq.s32.totalorder %s23, 1
      %p95 = por %p93, %p94
      %p96 = scmp.ne.s32.totalorder %s87, %s88
      %p97 = scmp.eq.s32.totalorder %s23, 0
      %p98 = por %p96, %p97
      %p99 = scmp.ne.s32.totalorder %s87, %s88
      %p100 = scmp.eq.s32.totalorder %s24, 1
      %p101 = por %p99, %p100
      %p103 = scmp.ne.s32.totalorder %s88, %s102
      %p104 = scmp.eq.s32.totalorder %s24, 0
      %p105 = por %p103, %p104
      %s107 = sadd.s32 %s106, 1
      %p110 = scmp.eq.s32.totalorder %s18, 1
      %p111 = scmp.ne.s32.totalorder %s106, %s108
      %p112 = scmp.eq.s32.totalorder %s18, 0
      %p113 = por %p111, %p112
      %p114 = scmp.ne.s32.totalorder %s106, %s108
      %p115 = scmp.eq.s32.totalorder %s23, 1
      %p116 = por %p114, %p115
      %p117 = scmp.ne.s32.totalorder %s108, %s109
      %p118 = scmp.eq.s32.totalorder %s23, 0
      %p119 = por %p117, %p118
      %p120 = scmp.ne.s32.totalorder %s108, %s109
      %p121 = scmp.eq.s32.totalorder %s24, 1
      %p122 = por %p120, %p121
      %p124 = scmp.ne.s32.totalorder %s109, %s123
      %p125 = scmp.eq.s32.totalorder %s24, 0
      %p126 = por %p124, %p125
      %s128 = sadd.s32 %s127, 1
      %p131 = scmp.eq.s32.totalorder %s18, 1
      %p132 = scmp.ne.s32.totalorder %s127, %s129
      %p133 = scmp.eq.s32.totalorder %s18, 0
      %p134 = por %p132, %p133
      %p135 = scmp.ne.s32.totalorder %s127, %s129
      %p136 = scmp.eq.s32.totalorder %s23, 1
      %p137 = por %p135, %p136
      %p138 = scmp.ne.s32.totalorder %s129, %s130
      %p139 = scmp.eq.s32.totalorder %s23, 0
      %p140 = por %p138, %p139
      %p141 = scmp.ne.s32.totalorder %s129, %s130
      %p142 = scmp.eq.s32.totalorder %s24, 1
      %p143 = por %p141, %p142
      %p145 = scmp.ne.s32.totalorder %s130, %s144
      %p146 = scmp.eq.s32.totalorder %s24, 0
      %p147 = por %p145, %p146
      %s148 = ssub.s32 %s25, %s37
      %s149 = ssub.s32 %s26, %s33
      %s150 = sor.u32 %s148, %s149
      %p151 = scmp.eq.s32.totalorder %s150, 0
      %s153 = sadd.s32 %s152, 1
      %s154 = scalar_select %p151, %s152, %s153
      %p157 = pneg %p151
      %p158 = scmp.eq.s32.totalorder %s18, 1
      %p159 = por %p157, %p158
      %p160 = scmp.ne.s32.totalorder %s152, %s155
      %p161 = scmp.eq.s32.totalorder %s18, 0
      %p162 = por %p160, %p161
      %p163 = scmp.ne.s32.totalorder %s152, %s155
      %p164 = scmp.eq.s32.totalorder %s23, 1
      %p165 = por %p163, %p164
      %p166 = scmp.ne.s32.totalorder %s155, %s156
      %p167 = scmp.eq.s32.totalorder %s23, 0
      %p168 = por %p166, %p167
      %p169 = scmp.ne.s32.totalorder %s155, %s156
      %p170 = scmp.eq.s32.totalorder %s24, 1
      %p171 = por %p169, %p170
      %p173 = scmp.ne.s32.totalorder %s156, %s172
      %p174 = scmp.eq.s32.totalorder %s24, 0
      %p175 = por %p173, %p174
      %p176 = scmp.le.s32.totalorder 1, %s18
      %p177 = scmp.lt.s32.totalorder %s18, 3
      %p178 = pnand %p176, %p177
      %p179 = pneg %p178
      // Predicated region
      $region9: #{tpu_custom_call.1} parent=5 // pred_check
        _
      $region10: #{tpu_custom_call.1} parent=5 // pred_check_branch
        %181 = sbr.rel (%p178) target = $region12
      $region11: #{tpu_custom_call.1} parent=5 // pred_region
        %s182 = ssub.s32 %s18, 1
        // Predicated region
        $region13: #{tpu_custom_call.1} parent=11 // pred_check
          %p183 = pneg %p77
        $region14: #{tpu_custom_call.1} parent=11 // pred_check_branch
          %185 = sbr.rel (%p183) target = $region16
        $region15: #{tpu_custom_call.1} parent=11 // pred_region
          %187 = vsyncadd [#allocation6], 0
          %s189 = sshll.u32 %s1, 4
          %s190 = int_to_ptr.hbm [resolvable:$true] %s189
          %s191 = sshll.u32 [#allocation5], 4
          %s192 = int_to_ptr.vmem [resolvable:$true] %s191
          %194 = dma.hbm_to_vmem [thread:$0]  %s190, 16, %s192, [#allocation6]
        $region16: #{tpu_custom_call.1} parent=11 // pred_fallthru
          _
        // Predicated region
        $region17: #{tpu_custom_call.1} parent=11 // pred_check
          %p195 = pneg %p98
        $region18: #{tpu_custom_call.1} parent=11 // pred_check_branch
          %197 = sbr.rel (%p195) target = $region20
        $region19: #{tpu_custom_call.1} parent=11 // pred_region
          _
        $region20: #{tpu_custom_call.1} parent=11 // pred_fallthru
          _
        // Predicated region
        $region21: #{tpu_custom_call.1} parent=11 // pred_check
          %p198 = pneg %p119
        $region22: #{tpu_custom_call.1} parent=11 // pred_check_branch
          %200 = sbr.rel (%p198) target = $region24
        $region23: #{tpu_custom_call.1} parent=11 // pred_region
          %202 = vsyncadd [#allocation6], 0
          %s203 = sshll.u32 %s3, 4
          %s204 = int_to_ptr.hbm [resolvable:$true] %s203
          %s205 = sshll.u32 [#allocation7], 4
          %s206 = int_to_ptr.vmem [resolvable:$true] %s205
          %211 = dma.hbm_to_vmem [thread:$0]  %s204, 256, %s206, [#allocation6], 64, 64, 4
        $region24: #{tpu_custom_call.1} parent=11 // pred_fallthru
          _
        // Predicated region
        $region25: #{tpu_custom_call.1} parent=11 // pred_check
          %p212 = pneg %p140
        $region26: #{tpu_custom_call.1} parent=11 // pred_check_branch
          %214 = sbr.rel (%p212) target = $region28
        $region27: #{tpu_custom_call.1} parent=11 // pred_region
          _
        $region28: #{tpu_custom_call.1} parent=11 // pred_fallthru
          _
      $region12: #{tpu_custom_call.1} parent=5 // pred_fallthru
        _
      %p215 = scmp.lt.s32.totalorder %s18, 2
      // Predicated region
      $region29: #{tpu_custom_call.1} parent=5 // pred_check
        %p216 = pneg %p215
      $region30: #{tpu_custom_call.1} parent=5 // pred_check_branch
        %218 = sbr.rel (%p216) target = $region32
      $region31: #{tpu_custom_call.1} parent=5 // pred_region
        // Predicated region
        $region33: #{tpu_custom_call.1} parent=31 // pred_check
          %p219 = pneg %p50
        $region34: #{tpu_custom_call.1} parent=31 // pred_check_branch
          %221 = sbr.rel (%p219) target = $region36
        $region35: #{tpu_custom_call.1} parent=31 // pred_region
          %s222 = sand.u32 %s40, 1
          %s223 = scalar_lea.sflag [#allocation3], %s222
          %s224 = sand.u32 %s40, 1
          %s225 = smul.addr %s224, 8
          %s226 = scalar_lea.vmem [#allocation2], %s225
          %228 = vsyncadd %s223, 0
          %s229 = smul.addr %s25, 8
          %s230 = scalar_lea.hbm %s0, %s229
          %s232 = sshll.u32 %s230, 4
          %s233 = int_to_ptr.hbm [resolvable:$true] %s232
          %s234 = sshll.u32 %s226, 4
          %s235 = int_to_ptr.vmem [resolvable:$true] %s234
          %237 = dma.hbm_to_vmem [thread:$0]  %s233, 128, %s235, %s223
        $region36: #{tpu_custom_call.1} parent=31 // pred_fallthru
          _
      $region32: #{tpu_custom_call.1} parent=5 // pred_fallthru
        _
      %p238 = scmp.le.s32.totalorder 1, %s18
      %p239 = scmp.lt.s32.totalorder %s18, 3
      %p240 = pnand %p238, %p239
      %p241 = pneg %p240
      // Predicated region
      $region37: #{tpu_custom_call.1} parent=5 // pred_check
        _
      $region38: #{tpu_custom_call.1} parent=5 // pred_check_branch
        %243 = sbr.rel (%p240) target = $region40
      $region39: #{tpu_custom_call.1} parent=5 // pred_region
        %s244 = ssub.s32 %s18, 1
        %s245 = sand.u32 %s43, 1
        %s246 = scalar_lea.sflag [#allocation3], %s245
        %s247 = sand.u32 %s43, 1
        %s248 = smul.addr %s247, 8
        %s249 = scalar_lea.vmem [#allocation2], %s248
        // Predicated region
        $region41: #{tpu_custom_call.1} parent=39 // pred_check
          %p250 = pneg %p56
        $region42: #{tpu_custom_call.1} parent=39 // pred_check_branch
          %252 = sbr.rel (%p250) target = $region44
        $region43: #{tpu_custom_call.1} parent=39 // pred_region
          %254 = dma.done %s246, 128
        $region44: #{tpu_custom_call.1} parent=39 // pred_fallthru
          _
        // Predicated region
        $region45: #{tpu_custom_call.1} parent=39 // pred_check
          %p255 = pneg %p77
        $region46: #{tpu_custom_call.1} parent=39 // pred_check_branch
          %257 = sbr.rel (%p255) target = $region48
        $region47: #{tpu_custom_call.1} parent=39 // pred_region
          %259 = dma.done [#allocation6], 16
        $region48: #{tpu_custom_call.1} parent=39 // pred_fallthru
          _
        // Predicated region
        $region49: #{tpu_custom_call.1} parent=39 // pred_check
          %p260 = pneg %p119
        $region50: #{tpu_custom_call.1} parent=39 // pred_check_branch
          %262 = sbr.rel (%p260) target = $region52
        $region51: #{tpu_custom_call.1} parent=39 // pred_region
          %264 = dma.done [#allocation6], 256
        $region52: #{tpu_custom_call.1} parent=39 // pred_fallthru
          _
        %s265 = sand.u32 %s43, 1
        %s266 = scalar_lea.sflag [#allocation3], %s265
        %s267 = sand.u32 %s43, 1
        %s268 = smul.addr %s267, 8
        %s269 = scalar_lea.vmem [#allocation2], %s268
        %p270 = pneg %p56
        %p271 = pneg %p53
        %p272 = pneg %p77
        %p273 = pneg %p74
        %p274 = pneg %p98
        %p275 = pneg %p95
        %p276 = pneg %p119
        %p277 = pneg %p116
        %p278 = pneg %p140
        %p279 = pneg %p137
        %p280 = pneg %p168
        %p281 = pneg %p165
        %s282 = sand.u32 %s155, 1
        %s283 = scalar_lea.sflag [#allocation4], %s282
        %s284 = sand.u32 %s155, 1
        %s285 = smul.addr %s284, 4
        %s286 = scalar_lea.vmem [#allocation8], %s285
        %v288 = vld [vmem:[%s249] sm:$0xff]
        %v289 = vld [vmem:[#allocation5] sm:$0x1]
        %v290 = vld [vmem:[%s2] sm:$0x1]
        %vm291 = vcmask 261120
        %v292 = vsel %vm291, %v288, 0.0
        %293 = vadd.xlane.f32.xlu0 %v292
        %v294 = vpop.xlane.xlu0 %293
        %v295 = vrcp.pop 32.0
        %v296 = vmul.f32 32.0, %v295
        %v297 = vsub.f32 1.0, %v296
        %v298 = vmul.f32 %v295, %v297
        %v299 = vadd.f32 %v295, %v298
        %vm300 = vweird.f32 %v295
        %v301 = vsel %vm300, %v295, %v299
        %v302 = vmul.f32 %v294, %v301
        %v303 = vsub.f32 %v288, %v302
        %v304 = vmul.f32 %v303, %v303
        %v305 = vsel %vm291, %v304, 0.0
        %306 = vadd.xlane.f32.xlu0 %v305
        %v307 = vpop.xlane.xlu0 %306
        %v308 = vmul.f32 %v307, %v301
        %v309 = vadd.f32 %v308, 1e-05
        %v310 = vrsqrt.pop %v309
        %v311 = vmul.f32 %v310, %v309
        %v312 = vmul.f32 %v311, %v310
        %v313 = vmul.f32 0.5, %v312
        %v314 = vsub.f32 1.5, %v313
        %v315 = vmul.f32 %v310, %v314
        %vm316 = vweird.f32 %v309
        %vm317 = vweird.f32 %v310
        %vm318 = vmor %vm316, %vm317
        %v319 = vsel %vm318, %v310, %v315
        %v320 = vmul.f32 %v303, %v319
        %v322 = vperm.slane %v289, 0
        %v324 = vmul.f32 %v320, %v322
        %v326 = vperm.slane %v290, 0
        %v328 = vadd.f32 %v324, %v326
        %v329 = vpack.c.bf16 %v328, %v328
        %s330 = smul.u32 %s28, 4
        %s331 = smul.addr %s330, 4
        %s332 = scalar_lea.vmem [#allocation7], %s331
        %v333 = vld [vmem:[%s332] sm:$0xf]
        %v334 = vld [vmem:[%s332 + $0x4] sm:$0xf]
        %v335 = vld [vmem:[%s332 + $0x8] sm:$0xf]
        %v336 = vld [vmem:[%s332 + $0xc] sm:$0xf]
        %s337 = scalar_lea.vmem %s4, %s28
        %v338 = vld [vmem:[%s337] sm:$0x1]
        %v340 = vperm.slane %v338, 0
        %v346 = vunpack.c.l.b16 %v333
        %v347 = vunpack.c.l.b16 %v334
        %v348 = vunpack.c.l.b16 %v335
        %v349 = vunpack.c.l.b16 %v336
        %v350 = vpack.c.b16 %v347, %v346
        %v351 = vpack.c.b16 %v349, %v348
        %v355 = vsel %vm291, %v329, 0
        %357 = vmatpush.bf16.msra.mxu0 0
        %358 = vmatpush.bf16.msra.mxu0 0
        %359 = vmatpush.bf16.msra.mxu0 0
        %360 = vmatpush.bf16.msra.mxu0 0
        %361 = vmatpush.bf16.msra.mxu0 0
        %362 = vmatpush.bf16.msra.mxu0 0
        %363 = vmatpush.bf16.msra.mxu0 %v351
        %364 = vmatpush.bf16.msra.mxu0 %v350
        %365 = vmatmul.bf16.gmra.mxu0 %v355
        %v366 = vpop.f32.mrf.mxu0
        %v367 = vadd.f32 %v340, %v366
        %v368 = vpop.f32.mrf.mxu0
        %369 = vdwg.mxu0
        %v370 = vpack.c.bf16 %v367, %v367
        %v372 = vunpack.c.l.b16 %v370
        %v373 = vpack.c.b16 %v372, %v372
        %374 = vrot.lane.b32.xlu0 %v373, 96
        %v375 = vpop.permute.xlu0 %374
        %vm376 = vcmask 64512
        %v378 = vsel %vm376, %v370, 0
        %v381 = vsel %vm376, %v375, 0
        %383 = vmatpush.bf16.xpose.msra.mxu0 0
        %384 = vmatpush.bf16.xpose.msra.mxu0 0
        %385 = vmatpush.bf16.xpose.msra.mxu0 0
        %386 = vmatpush.bf16.xpose.msra.mxu0 0
        %387 = vmatpush.bf16.xpose.msra.mxu0 0
        %388 = vmatpush.bf16.xpose.msra.mxu0 0
        %389 = vmatpush.bf16.xpose.msra.mxu0 0
        %390 = vmatpush.bf16.xpose.msra.mxu0 %v381
        %391 = vmatmul.bf16.gmra.mxu0 %v378
        %v392 = vpop.f32.mrf.mxu0
        %v393 = vadd.f32 0.0, %v392
        %v394 = vpop.f32.mrf.mxu0
        %395 = vdwg.mxu0
        %v396 = vsel %vm376, %v393, -inf
        %397 = vmax.xlane.f32.xlu0 %v396
        %v398 = vpop.xlane.xlu0 %397
        %v399 = vsub.f32 %v393, %v398
        %v400 = vmul.f32 %v399, 1.442695
        %v401 = vpow.pop %v400
        %v402 = vsel %vm376, %v401, 0.0
        %403 = vadd.xlane.f32.xlu0 %v402
        %v404 = vpop.xlane.xlu0 %403
        %v405 = vrcp.pop %v404
        %v406 = vmul.f32 %v401, %v405
        %v407 = vpack.c.bf16 %v406, %v406
        %408 = vrot.lane.b32.xlu0 %v373, 64
        %v409 = vpop.permute.xlu0 %408
        %v411 = vsel %vm376, %v407, 0
        %vm413 = vcmask 1043456
        %v415 = vsel %vm413, %v409, 0
        %417 = vmatpush.bf16.msra.mxu0 0
        %418 = vmatpush.bf16.msra.mxu0 0
        %419 = vmatpush.bf16.msra.mxu0 0
        %420 = vmatpush.bf16.msra.mxu0 0
        %421 = vmatpush.bf16.msra.mxu0 0
        %422 = vmatpush.bf16.msra.mxu0 0
        %423 = vmatpush.bf16.msra.mxu0 0
        %424 = vmatpush.bf16.msra.mxu0 %v415
        %425 = vmatmul.bf16.gmra.mxu0 %v411
        %v426 = vpop.f32.mrf.mxu0
        %v427 = vadd.f32 0.0, %v426
        %v428 = vpop.f32.mrf.mxu0
        %429 = vdwg.mxu0
        %430 = vrot.lane.b32.xlu0 %v373, 120
        %v431 = vpop.permute.xlu0 %430
        %432 = vrot.lane.b32.xlu0 %v373, 88
        %v433 = vpop.permute.xlu0 %432
        %v435 = vsel %vm376, %v431, 0
        %v438 = vsel %vm376, %v433, 0
        %440 = vmatpush.bf16.xpose.msra.mxu0 0
        %441 = vmatpush.bf16.xpose.msra.mxu0 0
        %442 = vmatpush.bf16.xpose.msra.mxu0 0
        %443 = vmatpush.bf16.xpose.msra.mxu0 0
        %444 = vmatpush.bf16.xpose.msra.mxu0 0
        %445 = vmatpush.bf16.xpose.msra.mxu0 0
        %446 = vmatpush.bf16.xpose.msra.mxu0 0
        %447 = vmatpush.bf16.xpose.msra.mxu0 %v438
        %448 = vmatmul.bf16.gmra.mxu0 %v435
        %v449 = vpop.f32.mrf.mxu0
        %v450 = vadd.f32 0.0, %v449
        %v451 = vpop.f32.mrf.mxu0
        %452 = vdwg.mxu0
        %v453 = vsel %vm376, %v450, -inf
        %454 = vmax.xlane.f32.xlu0 %v453
        %v455 = vpop.xlane.xlu0 %454
        %v456 = vsub.f32 %v450, %v455
        %v457 = vmul.f32 %v456, 1.442695
        %v458 = vpow.pop %v457
        %v459 = vsel %vm376, %v458, 0.0
        %460 = vadd.xlane.f32.xlu0 %v459
        %v461 = vpop.xlane.xlu0 %460
        %v462 = vrcp.pop %v461
        %v463 = vmul.f32 %v458, %v462
        %v464 = vpack.c.bf16 %v463, %v463
        %465 = vrot.lane.b32.xlu0 %v373, 56
        %v466 = vpop.permute.xlu0 %465
        %v468 = vsel %vm376, %v464, 0
        %v471 = vsel %vm413, %v466, 0
        %473 = vmatpush.bf16.msra.mxu0 0
        %474 = vmatpush.bf16.msra.mxu0 0
        %475 = vmatpush.bf16.msra.mxu0 0
        %476 = vmatpush.bf16.msra.mxu0 0
        %477 = vmatpush.bf16.msra.mxu0 0
        %478 = vmatpush.bf16.msra.mxu0 0
        %479 = vmatpush.bf16.msra.mxu0 0
        %480 = vmatpush.bf16.msra.mxu0 %v471
        %481 = vmatmul.bf16.gmra.mxu0 %v468
        %v482 = vpop.f32.mrf.mxu0
        %v483 = vadd.f32 0.0, %v482
        %v484 = vpop.f32.mrf.mxu0
        %485 = vdwg.mxu0
        %486 = vrot.lane.b32.xlu0 %v373, 112
        %v487 = vpop.permute.xlu0 %486
        %488 = vrot.lane.b32.xlu0 %v373, 80
        %v489 = vpop.permute.xlu0 %488
        %v491 = vsel %vm376, %v487, 0
        %v494 = vsel %vm376, %v489, 0
        %496 = vmatpush.bf16.xpose.msra.mxu0 0
        %497 = vmatpush.bf16.xpose.msra.mxu0 0
        %498 = vmatpush.bf16.xpose.msra.mxu0 0
        %499 = vmatpush.bf16.xpose.msra.mxu0 0
        %500 = vmatpush.bf16.xpose.msra.mxu0 0
        %501 = vmatpush.bf16.xpose.msra.mxu0 0
        %502 = vmatpush.bf16.xpose.msra.mxu0 0
        %503 = vmatpush.bf16.xpose.msra.mxu0 %v494
        %504 = vmatmul.bf16.gmra.mxu0 %v491
        %v505 = vpop.f32.mrf.mxu0
        %v506 = vadd.f32 0.0, %v505
        %v507 = vpop.f32.mrf.mxu0
        %508 = vdwg.mxu0
        %v509 = vsel %vm376, %v506, -inf
        %510 = vmax.xlane.f32.xlu0 %v509
        %v511 = vpop.xlane.xlu0 %510
        %v512 = vsub.f32 %v506, %v511
        %v513 = vmul.f32 %v512, 1.442695
        %v514 = vpow.pop %v513
        %v515 = vsel %vm376, %v514, 0.0
        %516 = vadd.xlane.f32.xlu0 %v515
        %v517 = vpop.xlane.xlu0 %516
        %v518 = vrcp.pop %v517
        %v519 = vmul.f32 %v514, %v518
        %v520 = vpack.c.bf16 %v519, %v519
        %521 = vrot.lane.b32.xlu0 %v373, 48
        %v522 = vpop.permute.xlu0 %521
        %v524 = vsel %vm376, %v520, 0
        %v527 = vsel %vm413, %v522, 0
        %529 = vmatpush.bf16.msra.mxu0 0
        %530 = vmatpush.bf16.msra.mxu0 0
        %531 = vmatpush.bf16.msra.mxu0 0
        %532 = vmatpush.bf16.msra.mxu0 0
        %533 = vmatpush.bf16.msra.mxu0 0
        %534 = vmatpush.bf16.msra.mxu0 0
        %535 = vmatpush.bf16.msra.mxu0 0
        %536 = vmatpush.bf16.msra.mxu0 %v527
        %537 = vmatmul.bf16.gmra.mxu0 %v524
        %v538 = vpop.f32.mrf.mxu0
        %v539 = vadd.f32 0.0, %v538
        %v540 = vpop.f32.mrf.mxu0
        %541 = vdwg.mxu0
        %542 = vrot.lane.b32.xlu0 %v373, 104
        %v543 = vpop.permute.xlu0 %542
        %544 = vrot.lane.b32.xlu0 %v373, 72
        %v545 = vpop.permute.xlu0 %544
        %v547 = vsel %vm376, %v543, 0
        %v550 = vsel %vm376, %v545, 0
        %552 = vmatpush.bf16.xpose.msra.mxu0 0
        %553 = vmatpush.bf16.xpose.msra.mxu0 0
        %554 = vmatpush.bf16.xpose.msra.mxu0 0
        %555 = vmatpush.bf16.xpose.msra.mxu0 0
        %556 = vmatpush.bf16.xpose.msra.mxu0 0
        %557 = vmatpush.bf16.xpose.msra.mxu0 0
        %558 = vmatpush.bf16.xpose.msra.mxu0 0
        %559 = vmatpush.bf16.xpose.msra.mxu0 %v550
        %560 = vmatmul.bf16.gmra.mxu0 %v547
        %v561 = vpop.f32.mrf.mxu0
        %v562 = vadd.f32 0.0, %v561
        %v563 = vpop.f32.mrf.mxu0
        %564 = vdwg.mxu0
        %v565 = vsel %vm376, %v562, -inf
        %566 = vmax.xlane.f32.xlu0 %v565
        %v567 = vpop.xlane.xlu0 %566
        %v568 = vsub.f32 %v562, %v567
        %v569 = vmul.f32 %v568, 1.442695
        %v570 = vpow.pop %v569
        %v571 = vsel %vm376, %v570, 0.0
        %572 = vadd.xlane.f32.xlu0 %v571
        %v573 = vpop.xlane.xlu0 %572
        %v574 = vrcp.pop %v573
        %v575 = vmul.f32 %v570, %v574
        %v576 = vpack.c.bf16 %v575, %v575
        %577 = vrot.lane.b32.xlu0 %v373, 40
        %v578 = vpop.permute.xlu0 %577
        %v580 = vsel %vm376, %v576, 0
        %v583 = vsel %vm413, %v578, 0
        %585 = vmatpush.bf16.msra.mxu0 0
        %586 = vmatpush.bf16.msra.mxu0 0
        %587 = vmatpush.bf16.msra.mxu0 0
        %588 = vmatpush.bf16.msra.mxu0 0
        %589 = vmatpush.bf16.msra.mxu0 0
        %590 = vmatpush.bf16.msra.mxu0 0
        %591 = vmatpush.bf16.msra.mxu0 0
        %592 = vmatpush.bf16.msra.mxu0 %v583
        %593 = vmatmul.bf16.gmra.mxu0 %v580
        %v594 = vpop.f32.mrf.mxu0
        %v595 = vadd.f32 0.0, %v594
        %v596 = vpop.f32.mrf.mxu0
        %597 = vdwg.mxu0
        %599 = vrot.lane.b32.xlu0 %v483, 8
        %v600 = vpop.permute.xlu0 %599
        %603 = vrot.lane.b32.xlu0 %v539, 16
        %v604 = vpop.permute.xlu0 %603
        %607 = vrot.lane.b32.xlu0 %v595, 24
        %v608 = vpop.permute.xlu0 %607
        %v610 = vsel %vm376, %v427, %v600
        %vm611 = vcmask 130048
        %v612 = vsel %vm611, %v610, %v604
        %vm613 = vcmask 195584
        %v614 = vsel %vm613, %v612, %v608
        %v615 = vpack.c.bf16 %v614, %v614
        %vm616 = vcmask 257024
        %617 = vst.msk [vmem:[%s286] sm:$0xf] %vm616, %v615
        %s618 = sand.u32 %s155, 1
        %s619 = scalar_lea.sflag [#allocation4], %s618
        %s620 = sand.u32 %s155, 1
        %s621 = smul.addr %s620, 4
        %s622 = scalar_lea.vmem [#allocation8], %s621
        // Predicated region
        $region53: #{tpu_custom_call.1} parent=39 // pred_check
          %p623 = pneg %p165
        $region54: #{tpu_custom_call.1} parent=39 // pred_check_branch
          %625 = sbr.rel (%p623) target = $region56
        $region55: #{tpu_custom_call.1} parent=39 // pred_region
          %627 = vsyncadd %s619, 0
          %s628 = sadd.s32 %s28, %s27
          %s629 = smul.addr %s628, 4
          %s630 = scalar_lea.hbm %s5, %s629
          %s632 = sshll.u32 %s622, 4
          %s633 = int_to_ptr.vmem [resolvable:$true] %s632
          %s634 = sshll.u32 %s630, 4
          %s635 = int_to_ptr.hbm [resolvable:$true] %s634
          %637 = dma.vmem_to_hbm [thread:$0]  %s633, 64, %s635, %s619
        $region56: #{tpu_custom_call.1} parent=39 // pred_fallthru
          _
      $region40: #{tpu_custom_call.1} parent=5 // pred_fallthru
        _
      %p638 = scmp.le.s32.totalorder 2, %s18
      // Predicated region
      $region57: #{tpu_custom_call.1} parent=5 // pred_check
        %p639 = pneg %p638
      $region58: #{tpu_custom_call.1} parent=5 // pred_check_branch
        %641 = sbr.rel (%p639) target = $region60
      $region59: #{tpu_custom_call.1} parent=5 // pred_region
        %s642 = ssub.s32 %s18, 2
        // Predicated region
        $region61: #{tpu_custom_call.1} parent=59 // pred_check
          %p643 = pneg %p171
        $region62: #{tpu_custom_call.1} parent=59 // pred_check_branch
          %645 = sbr.rel (%p643) target = $region64
        $region63: #{tpu_custom_call.1} parent=59 // pred_region
          %s646 = sand.u32 %s156, 1
          %s647 = scalar_lea.sflag [#allocation4], %s646
          %s648 = sand.u32 %s156, 1
          %s649 = smul.addr %s648, 4
          %s650 = scalar_lea.vmem [#allocation8], %s649
          %652 = dma.done %s647, 64
        $region64: #{tpu_custom_call.1} parent=59 // pred_fallthru
          _
      $region60: #{tpu_custom_call.1} parent=5 // pred_fallthru
        _
    $region6: #{tpu_custom_call.1} parent=1 // loop_footer
      %s22 = sadd.s32 1, %s18
    $region7: #{tpu_custom_call.1} parent=1 // loop_footer_branch
      %17 = sbr.rel target = $region3
    $region8: #{tpu_custom_call.1} parent=1 // loop_exit
      _
    %653 = vsyncpa [#allocation3], 1
    %s654 = scalar_lea.sflag [#allocation3], 1
    %655 = vsyncpa %s654, 1
    %656 = vsyncpa [#allocation6], 1
    %657 = vsyncpa [#allocation4], 1
    %s658 = scalar_lea.sflag [#allocation4], 1
    %659 = vsyncpa %s658, 1

</llo_original>
